<compile_context>
chip_gen: v7x
topology: tpu7x:2x2x1
jax: 0.10.0
libtpu: 0.0.40
codegen_flags: <defaults>
</compile_context>

<pallas_src>
import functools

import jax
import jax.numpy as jnp
from jax.experimental import pallas as pl
from jax.experimental.pallas import tpu as pltpu


def _round_up(a, b):
    return (a + b - 1) // b * b


def _mlp_kernel(x_ref, w1_ref, b1_ref, w2_ref, b2_ref, w3_ref, b3_ref, o_ref):
    """Fused 3-layer MLP on one row-tile: (linear -> relu) x2 -> linear.

    x/W are low-precision (bf16) MXU operands; accumulation, bias add and
    ReLU are f32.  Hidden/output feature dims are already lane-padded to 128
    by the wrapper, so all dots and the output store are lane-dense.
    """
    # layer 0: Linear(input_dim, hidden_dim) + ReLU
    h = jnp.dot(x_ref[...], w1_ref[...], preferred_element_type=jnp.float32)
    h = jnp.maximum(h + b1_ref[...], 0.0)

    # layer 1: Linear(hidden_dim, hidden_dim) + ReLU
    h = jnp.dot(h.astype(w2_ref.dtype), w2_ref[...],
                preferred_element_type=jnp.float32)
    h = jnp.maximum(h + b2_ref[...], 0.0)

    # layer 2 (output): Linear(hidden_dim, output_dim), no activation
    y = jnp.dot(h.astype(w3_ref.dtype), w3_ref[...],
                preferred_element_type=jnp.float32)
    y = y + b3_ref[...]
    o_ref[...] = y.astype(o_ref.dtype)


@functools.partial(jax.jit, static_argnames=("tm", "compute_dtype"))
def mlp_forward(x, params, *, tm=512, compute_dtype=jnp.bfloat16):
    """x: [B, N, F_in]  ->  [B, N, F_out]."""
    w1, b1, w2, b2, w3, b3 = params
    B, N, f_in = x.shape
    hidden = w1.shape[1]
    f_out = w3.shape[1]
    M = B * N

    LANE = 128      # vreg lane width: lane-dense matmul N-dims / output stores
    SUBLANE = 16    # row-tile granularity (16 covers bf16 sublane packing)

    h_p = _round_up(hidden, LANE)
    f_out_p = _round_up(f_out, LANE)

    # Row tile: as large as requested, but keep >= 2 grid steps so v7x's two
    # TensorCores both get work (megacore sharding of the "parallel" axis).
    tm_eff = max(SUBLANE, min(tm, _round_up(-(-M // 2), SUBLANE)))
    m_pad = _round_up(M, tm_eff)
    grid = (m_pad // tm_eff,)

    out_dtype = x.dtype

    # Flatten rows, cast MXU operands to the compute dtype, pad the row tail.
    x2d = x.reshape(M, f_in).astype(compute_dtype)
    if m_pad != M:
        x2d = jnp.pad(x2d, ((0, m_pad - M), (0, 0)))

    # Zero-pad hidden / output feature dims to the 128-lane width.  Padded
    # hidden columns get bias 0 -> relu(0) = 0, and the matching padded rows
    # of the next weight matrix are 0, so the math is unchanged.
    w1p = jnp.pad(w1, ((0, 0), (0, h_p - hidden))).astype(compute_dtype)
    b1p = jnp.pad(b1, (0, h_p - hidden)).astype(jnp.float32).reshape(1, h_p)
    w2p = jnp.pad(w2, ((0, h_p - hidden), (0, h_p - hidden))).astype(compute_dtype)
    b2p = jnp.pad(b2, (0, h_p - hidden)).astype(jnp.float32).reshape(1, h_p)
    w3p = jnp.pad(w3, ((0, h_p - hidden), (0, f_out_p - f_out))).astype(compute_dtype)
    b3p = jnp.pad(b3, (0, f_out_p - f_out)).astype(jnp.float32).reshape(1, f_out_p)

    # VMEM budget: double-buffered streaming x/out tiles + resident weights.
    # Cap at 48 MiB so the same configuration fits v7x's 64 MiB physical VMEM.
    c_bytes = jnp.dtype(compute_dtype).itemsize
    o_bytes = jnp.dtype(out_dtype).itemsize
    est = 2 * tm_eff * (f_in * c_bytes + f_out_p * o_bytes)
    est += 2 * ((f_in * h_p + h_p * h_p + h_p * f_out_p) * c_bytes
                + (2 * h_p + f_out_p) * 4)
    vmem_limit = int(min(max(4 * est, 8 << 20), 48 << 20))

    full = lambda i: (0, 0)  # weights/biases: same (whole) block for every tile

    out2d = pl.pallas_call(
        _mlp_kernel,
        out_shape=jax.ShapeDtypeStruct((m_pad, f_out_p), out_dtype),
        grid_spec=pltpu.PrefetchScalarGridSpec(
            num_scalar_prefetch=0,
            grid=grid,
            in_specs=[
                # Streaming x row tile.  If xprof shows exposed DMA at large
                # tm, deepen with pipeline_mode=pl.Buffered(3).
                pl.BlockSpec((tm_eff, f_in), lambda i: (i, 0)),
                pl.BlockSpec((f_in, h_p), full),       # W1 (in, out), resident
                pl.BlockSpec((1, h_p), full),          # b1 (f32)
                pl.BlockSpec((h_p, h_p), full),        # W2
                pl.BlockSpec((1, h_p), full),          # b2
                pl.BlockSpec((h_p, f_out_p), full),    # W3
                pl.BlockSpec((1, f_out_p), full),      # b3
            ],
            out_specs=pl.BlockSpec((tm_eff, f_out_p), lambda i: (i, 0)),
        ),
        compiler_params=pltpu.CompilerParams(
            dimension_semantics=("parallel",),
            vmem_limit_bytes=vmem_limit,
        ),
    )(x2d, w1p, b1p, w2p, b2p, w3p, b3p)

    # Strip row padding and lane padding; reshape back to [B, N, F_out].
    return out2d[:M, :f_out].reshape(B, N, f_out)


def init_mlp_params(key, input_dim, hidden_dim, output_dim):
    """Deterministic init. Weights stored as [in, out] (nn.Linear W^T)."""
    ks = jax.random.split(key, 6)
    scale = lambda fan_in: 1.0 / jnp.sqrt(jnp.float32(fan_in))
    w1 = jax.random.uniform(ks[0], (input_dim, hidden_dim), jnp.float32,
                            -scale(input_dim), scale(input_dim))
    b1 = jax.random.uniform(ks[1], (hidden_dim,), jnp.float32,
                            -scale(input_dim), scale(input_dim))
    w2 = jax.random.uniform(ks[2], (hidden_dim, hidden_dim), jnp.float32,
                            -scale(hidden_dim), scale(hidden_dim))
    b2 = jax.random.uniform(ks[3], (hidden_dim,), jnp.float32,
                            -scale(hidden_dim), scale(hidden_dim))
    w3 = jax.random.uniform(ks[4], (hidden_dim, output_dim), jnp.float32,
                            -scale(hidden_dim), scale(hidden_dim))
    b3 = jax.random.uniform(ks[5], (output_dim,), jnp.float32,
                            -scale(hidden_dim), scale(hidden_dim))
    return (w1, b1, w2, b2, w3, b3)


def mlp_reference(x, params, compute_dtype=jnp.float32):
    """Pure-JAX reference matching the PyTorch forward (num_layers=3, relu).

    With compute_dtype=bf16 it mirrors the kernel's precision contract
    (bf16 MXU operands, f32 accumulation / bias / ReLU).
    """
    w1, b1, w2, b2, w3, b3 = params
    cd = compute_dtype
    h = jnp.dot(x.astype(cd), w1.astype(cd),
                preferred_element_type=jnp.float32) + b1
    h = jnp.maximum(h, 0.0)
    h = jnp.dot(h.astype(cd), w2.astype(cd),
                preferred_element_type=jnp.float32) + b2
    h = jnp.maximum(h, 0.0)
    return jnp.dot(h.astype(cd), w3.astype(cd),
                   preferred_element_type=jnp.float32) + b3


if __name__ == "__main__":
    # Small shapes consistent with the forward: x is [batch, N, F_i].
    # N=9 -> M=18 rows, deliberately NOT a multiple of the row tile, to
    # exercise the padded-tail path.
    num_layers, input_dim, hidden_dim, output_dim = 3, 16, 32, 16
    B, N = 2, 9

    key = jax.random.PRNGKey(0)
    kx, kp = jax.random.split(key)
    x = jax.random.normal(kx, (B, N, input_dim), dtype=jnp.float32)
    params = init_mlp_params(kp, input_dim, hidden_dim, output_dim)

    y = mlp_forward(x, params)
    y = jax.block_until_ready(y)
    assert y.shape == (B, N, output_dim)

    # Precision-matched reference (bf16 operands, f32 accumulation) — tight.
    y_ref_bf16 = mlp_reference(x, params, compute_dtype=jnp.bfloat16)
    assert jnp.allclose(y, y_ref_bf16, atol=1e-2, rtol=1e-2), \
        "mismatch vs precision-matched reference"

    # Full-f32 reference — loose tolerance covers bf16 operand rounding.
    y_ref_f32 = mlp_reference(x, params, compute_dtype=jnp.float32)
    assert jnp.allclose(y, y_ref_f32, atol=0.25, rtol=0.05), \
        "mismatch vs f32 reference"

    print("KERNEL_OK")
</pallas_src>

<mosaic_0001>
module attributes {stable_mosaic.version = 11 : i64} {
  func.func @_mlp_kernel(%arg0: i32, %arg1: memref<16x16xbf16, #tpu.memory_space<vmem>>, %arg2: memref<16x128xbf16, #tpu.memory_space<vmem>>, %arg3: memref<1x128xf32, #tpu.memory_space<vmem>>, %arg4: memref<128x128xbf16, #tpu.memory_space<vmem>>, %arg5: memref<1x128xf32, #tpu.memory_space<vmem>>, %arg6: memref<128x128xbf16, #tpu.memory_space<vmem>>, %arg7: memref<1x128xf32, #tpu.memory_space<vmem>>, %arg8: memref<16x128xf32, #tpu.memory_space<vmem>>) attributes {dimension_semantics = [#tpu.dimension_semantics<parallel>], iteration_bounds = array<i64: 2>, scalar_prefetch = 0 : i64, scratch_operands = 0 : i64, tpu.core_type = #tpu.core_type<tc>, window_params = [{transform_indices = @transform_0, window_bounds = array<i64: 16, 16>}, {pipeline_mode = #tpu.pipeline_mode<synchronous>, transform_indices = @transform_1, window_bounds = array<i64: 16, 128>}, {pipeline_mode = #tpu.pipeline_mode<synchronous>, transform_indices = @transform_2, window_bounds = array<i64: 1, 128>}, {pipeline_mode = #tpu.pipeline_mode<synchronous>, transform_indices = @transform_3, window_bounds = array<i64: 128, 128>}, {pipeline_mode = #tpu.pipeline_mode<synchronous>, transform_indices = @transform_4, window_bounds = array<i64: 1, 128>}, {pipeline_mode = #tpu.pipeline_mode<synchronous>, transform_indices = @transform_5, window_bounds = array<i64: 128, 128>}, {pipeline_mode = #tpu.pipeline_mode<synchronous>, transform_indices = @transform_6, window_bounds = array<i64: 1, 128>}, {transform_indices = @transform_7, window_bounds = array<i64: 16, 128>}]} {
    %c0 = arith.constant 0 : index
    %c0_0 = arith.constant 0 : index
    %0 = vector.load %arg1[%c0, %c0_0] : memref<16x16xbf16, #tpu.memory_space<vmem>>, vector<16x16xbf16>
    %c0_1 = arith.constant 0 : index
    %c0_2 = arith.constant 0 : index
    %1 = vector.load %arg2[%c0_1, %c0_2] : memref<16x128xbf16, #tpu.memory_space<vmem>>, vector<16x128xbf16>
    %cst = arith.constant dense<0.000000e+00> : vector<16x128xf32>
    %2 = tpu.matmul %0, %1, %cst {dimension_numbers = #tpu.dot_dimension_numbers<[1], [0], [0], [1], [0, 0, 1, 1], [], []>} : vector<16x16xbf16>, vector<16x128xbf16>, vector<16x128xf32> -> vector<16x128xf32>
    %c0_3 = arith.constant 0 : index
    %c0_4 = arith.constant 0 : index
    %3 = vector.load %arg3[%c0_3, %c0_4] : memref<1x128xf32, #tpu.memory_space<vmem>>, vector<1x128xf32>
    %4 = vector.broadcast %3 : vector<1x128xf32> to vector<16x128xf32>
    %5 = arith.addf %2, %4 : vector<16x128xf32>
    %cst_5 = arith.constant 0.000000e+00 : f32
    %6 = vector.broadcast %cst_5 : f32 to vector<16x128xf32>
    %7 = arith.maximumf %5, %6 : vector<16x128xf32>
    %8 = arith.truncf %7 : vector<16x128xf32> to vector<16x128xbf16>
    %c0_6 = arith.constant 0 : index
    %c0_7 = arith.constant 0 : index
    %9 = vector.load %arg4[%c0_6, %c0_7] : memref<128x128xbf16, #tpu.memory_space<vmem>>, vector<128x128xbf16>
    %cst_8 = arith.constant dense<0.000000e+00> : vector<16x128xf32>
    %10 = tpu.matmul %8, %9, %cst_8 {dimension_numbers = #tpu.dot_dimension_numbers<[1], [0], [0], [1], [0, 0, 1, 1], [], []>} : vector<16x128xbf16>, vector<128x128xbf16>, vector<16x128xf32> -> vector<16x128xf32>
    %c0_9 = arith.constant 0 : index
    %c0_10 = arith.constant 0 : index
    %11 = vector.load %arg5[%c0_9, %c0_10] : memref<1x128xf32, #tpu.memory_space<vmem>>, vector<1x128xf32>
    %12 = vector.broadcast %11 : vector<1x128xf32> to vector<16x128xf32>
    %13 = arith.addf %10, %12 : vector<16x128xf32>
    %cst_11 = arith.constant 0.000000e+00 : f32
    %14 = vector.broadcast %cst_11 : f32 to vector<16x128xf32>
    %15 = arith.maximumf %13, %14 : vector<16x128xf32>
    %16 = arith.truncf %15 : vector<16x128xf32> to vector<16x128xbf16>
    %c0_12 = arith.constant 0 : index
    %c0_13 = arith.constant 0 : index
    %17 = vector.load %arg6[%c0_12, %c0_13] : memref<128x128xbf16, #tpu.memory_space<vmem>>, vector<128x128xbf16>
    %cst_14 = arith.constant dense<0.000000e+00> : vector<16x128xf32>
    %18 = tpu.matmul %16, %17, %cst_14 {dimension_numbers = #tpu.dot_dimension_numbers<[1], [0], [0], [1], [0, 0, 1, 1], [], []>} : vector<16x128xbf16>, vector<128x128xbf16>, vector<16x128xf32> -> vector<16x128xf32>
    %c0_15 = arith.constant 0 : index
    %c0_16 = arith.constant 0 : index
    %19 = vector.load %arg7[%c0_15, %c0_16] : memref<1x128xf32, #tpu.memory_space<vmem>>, vector<1x128xf32>
    %20 = vector.broadcast %19 : vector<1x128xf32> to vector<16x128xf32>
    %21 = arith.addf %18, %20 : vector<16x128xf32>
    %c0_17 = arith.constant 0 : index
    %c0_18 = arith.constant 0 : index
    %22 = vector.load %arg8[%c0_17, %c0_18] : memref<16x128xf32, #tpu.memory_space<vmem>>, vector<16x128xf32>
    tpu.vector_store %arg8[%c0_17, %c0_18], %21 {strides = array<i32>} : memref<16x128xf32, #tpu.memory_space<vmem>>, vector<16x128xf32>,
    return
  }
  func.func @transform_0(%arg0: i32) -> (i32, i32) {
    %c0_i32 = arith.constant 0 : i32
    %c0_i32_0 = arith.constant 0 : i32
    return %arg0, %c0_i32 : i32, i32
  }
  func.func @transform_1(%arg0: i32) -> (i32, i32) {
    %c0_i32 = arith.constant 0 : i32
    %c0_i32_0 = arith.constant 0 : i32
    %c0_i32_1 = arith.constant 0 : i32
    return %c0_i32, %c0_i32_0 : i32, i32
  }
  func.func @transform_2(%arg0: i32) -> (i32, i32) {
    %c0_i32 = arith.constant 0 : i32
    %c0_i32_0 = arith.constant 0 : i32
    %c0_i32_1 = arith.constant 0 : i32
    return %c0_i32, %c0_i32_0 : i32, i32
  }
  func.func @transform_3(%arg0: i32) -> (i32, i32) {
    %c0_i32 = arith.constant 0 : i32
    %c0_i32_0 = arith.constant 0 : i32
    %c0_i32_1 = arith.constant 0 : i32
    return %c0_i32, %c0_i32_0 : i32, i32
  }
  func.func @transform_4(%arg0: i32) -> (i32, i32) {
    %c0_i32 = arith.constant 0 : i32
    %c0_i32_0 = arith.constant 0 : i32
    %c0_i32_1 = arith.constant 0 : i32
    return %c0_i32, %c0_i32_0 : i32, i32
  }
  func.func @transform_5(%arg0: i32) -> (i32, i32) {
    %c0_i32 = arith.constant 0 : i32
    %c0_i32_0 = arith.constant 0 : i32
    %c0_i32_1 = arith.constant 0 : i32
    return %c0_i32, %c0_i32_0 : i32, i32
  }
  func.func @transform_6(%arg0: i32) -> (i32, i32) {
    %c0_i32 = arith.constant 0 : i32
    %c0_i32_0 = arith.constant 0 : i32
    %c0_i32_1 = arith.constant 0 : i32
    return %c0_i32, %c0_i32_0 : i32, i32
  }
  func.func @transform_7(%arg0: i32) -> (i32, i32) {
    %c0_i32 = arith.constant 0 : i32
    %c0_i32_0 = arith.constant 0 : i32
    return %arg0, %c0_i32 : i32, i32
  }
}

</mosaic_0001>

<llo_original>
// kernel: mlp_forward.1
$region0: #{mlp_forward.1}
  #allocation0 [shape = 'u32[]', space=smem, size = 0x4, offset = 0x4, fixed_abs, tag = 'smem constant byte address 0x4 - core index']
  #allocation1 [shape = 'u32[144,128]{1,0:T(1,128)}', space=vmem, size = 0x12000, scoped, tag = 'internal scratch']
  %s0 = inlined_call_operand.vmem [shape: bf16[32,16], index: 0, kind: input, shape index: {}]
  %s1 = inlined_call_operand.vmem [shape: bf16[16,128], index: 1, kind: input, shape index: {}]
  %s2 = inlined_call_operand.vmem [shape: f32[1,128], index: 2, kind: input, shape index: {}]
  %s3 = inlined_call_operand.vmem [shape: bf16[128,128], index: 3, kind: input, shape index: {}]
  %s4 = inlined_call_operand.vmem [shape: f32[1,128], index: 4, kind: input, shape index: {}]
  %s5 = inlined_call_operand.vmem [shape: bf16[128,128], index: 5, kind: input, shape index: {}]
  %s6 = inlined_call_operand.vmem [shape: f32[1,128], index: 6, kind: input, shape index: {}]
  %s7 = inlined_call_operand.vmem [shape: f32[32,128], index: 7, kind: output, shape index: {}]
  %s8 = sld [smem:[#allocation0]]
  $region61: #{mlp_forward.1} parent=0
    _
  %s10 = ssub.s32 1, %s8
  %s11 = scalar_select 0, %s10, %s8
  loop: start=0, step=1, limit=4
  $region2: #{mlp_forward.1} parent=0 // loop_pre_header
    _
  $region3: #{mlp_forward.1} parent=0 // loop_header
    %s13 = sphi 0, %s17
    %p14 = scmp.ge.s32.totalorder %s13, 4
    %s23 = sphi 0, %s25
    %s26 = sphi 0, %s23
    %s27 = sphi 0, %s26
    %s43 = sphi 0, %s27
    %s47 = sphi 0, %s47
    %s49 = sphi 0, %s47
    %s50 = sphi 0, %s49
    %s64 = sphi 0, %s50
    %s68 = sphi 0, %s68
    %s70 = sphi 0, %s68
    %s71 = sphi 0, %s70
    %s85 = sphi 0, %s71
    %s89 = sphi 0, %s89
    %s91 = sphi 0, %s89
    %s92 = sphi 0, %s91
    %s106 = sphi 0, %s92
    %s110 = sphi 0, %s110
    %s112 = sphi 0, %s110
    %s113 = sphi 0, %s112
    %s127 = sphi 0, %s113
    %s131 = sphi 0, %s131
    %s133 = sphi 0, %s131
    %s134 = sphi 0, %s133
    %s148 = sphi 0, %s134
    %s152 = sphi 0, %s152
    %s154 = sphi 0, %s152
    %s155 = sphi 0, %s154
    %s169 = sphi 0, %s155
    %s175 = sphi 0, %s177
    %s178 = sphi 0, %s175
    %s179 = sphi 0, %s178
    %s195 = sphi 0, %s179
  $region4: #{mlp_forward.1} parent=0 // loop_header_branch
    %16 = sbr.rel (%p14) target = $region8
  $region5: #{mlp_forward.1} parent=0 // loop_body
    %s18 = ssub.s32 %s13, 1
    %s19 = ssub.s32 %s13, 2
    %s20 = sadd.s32 %s13, 1
    %s21 = ssub.s32 %s13, %s20
    %p22 = scmp.eq.s32.totalorder %s21, 0
    %s24 = sadd.s32 %s23, 1
    %s25 = scalar_select %p22, %s23, %s24
    %p28 = pneg %p22
    %p29 = scmp.eq.s32.totalorder %s13, 1
    %p30 = por %p28, %p29
    %p31 = scmp.ne.s32.totalorder %s23, %s26
    %p32 = scmp.eq.s32.totalorder %s13, 0
    %p33 = por %p31, %p32
    %p34 = scmp.ne.s32.totalorder %s23, %s26
    %p35 = scmp.eq.s32.totalorder %s18, 1
    %p36 = por %p34, %p35
    %p37 = scmp.ne.s32.totalorder %s26, %s27
    %p38 = scmp.eq.s32.totalorder %s18, 0
    %p39 = por %p37, %p38
    %p40 = scmp.ne.s32.totalorder %s26, %s27
    %p41 = scmp.eq.s32.totalorder %s19, 1
    %p42 = por %p40, %p41
    %p44 = scmp.ne.s32.totalorder %s27, %s43
    %p45 = scmp.eq.s32.totalorder %s19, 0
    %p46 = por %p44, %p45
    %s48 = sadd.s32 %s47, 1
    %p51 = scmp.eq.s32.totalorder %s13, 1
    %p52 = scmp.ne.s32.totalorder %s47, %s49
    %p53 = scmp.eq.s32.totalorder %s13, 0
    %p54 = por %p52, %p53
    %p55 = scmp.ne.s32.totalorder %s47, %s49
    %p56 = scmp.eq.s32.totalorder %s18, 1
    %p57 = por %p55, %p56
    %p58 = scmp.ne.s32.totalorder %s49, %s50
    %p59 = scmp.eq.s32.totalorder %s18, 0
    %p60 = por %p58, %p59
    %p61 = scmp.ne.s32.totalorder %s49, %s50
    %p62 = scmp.eq.s32.totalorder %s19, 1
    %p63 = por %p61, %p62
    %p65 = scmp.ne.s32.totalorder %s50, %s64
    %p66 = scmp.eq.s32.totalorder %s19, 0
    %p67 = por %p65, %p66
    %s69 = sadd.s32 %s68, 1
    %p72 = scmp.eq.s32.totalorder %s13, 1
    %p73 = scmp.ne.s32.totalorder %s68, %s70
    %p74 = scmp.eq.s32.totalorder %s13, 0
    %p75 = por %p73, %p74
    %p76 = scmp.ne.s32.totalorder %s68, %s70
    %p77 = scmp.eq.s32.totalorder %s18, 1
    %p78 = por %p76, %p77
    %p79 = scmp.ne.s32.totalorder %s70, %s71
    %p80 = scmp.eq.s32.totalorder %s18, 0
    %p81 = por %p79, %p80
    %p82 = scmp.ne.s32.totalorder %s70, %s71
    %p83 = scmp.eq.s32.totalorder %s19, 1
    %p84 = por %p82, %p83
    %p86 = scmp.ne.s32.totalorder %s71, %s85
    %p87 = scmp.eq.s32.totalorder %s19, 0
    %p88 = por %p86, %p87
    %s90 = sadd.s32 %s89, 1
    %p93 = scmp.eq.s32.totalorder %s13, 1
    %p94 = scmp.ne.s32.totalorder %s89, %s91
    %p95 = scmp.eq.s32.totalorder %s13, 0
    %p96 = por %p94, %p95
    %p97 = scmp.ne.s32.totalorder %s89, %s91
    %p98 = scmp.eq.s32.totalorder %s18, 1
    %p99 = por %p97, %p98
    %p100 = scmp.ne.s32.totalorder %s91, %s92
    %p101 = scmp.eq.s32.totalorder %s18, 0
    %p102 = por %p100, %p101
    %p103 = scmp.ne.s32.totalorder %s91, %s92
    %p104 = scmp.eq.s32.totalorder %s19, 1
    %p105 = por %p103, %p104
    %p107 = scmp.ne.s32.totalorder %s92, %s106
    %p108 = scmp.eq.s32.totalorder %s19, 0
    %p109 = por %p107, %p108
    %s111 = sadd.s32 %s110, 1
    %p114 = scmp.eq.s32.totalorder %s13, 1
    %p115 = scmp.ne.s32.totalorder %s110, %s112
    %p116 = scmp.eq.s32.totalorder %s13, 0
    %p117 = por %p115, %p116
    %p118 = scmp.ne.s32.totalorder %s110, %s112
    %p119 = scmp.eq.s32.totalorder %s18, 1
    %p120 = por %p118, %p119
    %p121 = scmp.ne.s32.totalorder %s112, %s113
    %p122 = scmp.eq.s32.totalorder %s18, 0
    %p123 = por %p121, %p122
    %p124 = scmp.ne.s32.totalorder %s112, %s113
    %p125 = scmp.eq.s32.totalorder %s19, 1
    %p126 = por %p124, %p125
    %p128 = scmp.ne.s32.totalorder %s113, %s127
    %p129 = scmp.eq.s32.totalorder %s19, 0
    %p130 = por %p128, %p129
    %s132 = sadd.s32 %s131, 1
    %p135 = scmp.eq.s32.totalorder %s13, 1
    %p136 = scmp.ne.s32.totalorder %s131, %s133
    %p137 = scmp.eq.s32.totalorder %s13, 0
    %p138 = por %p136, %p137
    %p139 = scmp.ne.s32.totalorder %s131, %s133
    %p140 = scmp.eq.s32.totalorder %s18, 1
    %p141 = por %p139, %p140
    %p142 = scmp.ne.s32.totalorder %s133, %s134
    %p143 = scmp.eq.s32.totalorder %s18, 0
    %p144 = por %p142, %p143
    %p145 = scmp.ne.s32.totalorder %s133, %s134
    %p146 = scmp.eq.s32.totalorder %s19, 1
    %p147 = por %p145, %p146
    %p149 = scmp.ne.s32.totalorder %s134, %s148
    %p150 = scmp.eq.s32.totalorder %s19, 0
    %p151 = por %p149, %p150
    %s153 = sadd.s32 %s152, 1
    %p156 = scmp.eq.s32.totalorder %s13, 1
    %p157 = scmp.ne.s32.totalorder %s152, %s154
    %p158 = scmp.eq.s32.totalorder %s13, 0
    %p159 = por %p157, %p158
    %p160 = scmp.ne.s32.totalorder %s152, %s154
    %p161 = scmp.eq.s32.totalorder %s18, 1
    %p162 = por %p160, %p161
    %p163 = scmp.ne.s32.totalorder %s154, %s155
    %p164 = scmp.eq.s32.totalorder %s18, 0
    %p165 = por %p163, %p164
    %p166 = scmp.ne.s32.totalorder %s154, %s155
    %p167 = scmp.eq.s32.totalorder %s19, 1
    %p168 = por %p166, %p167
    %p170 = scmp.ne.s32.totalorder %s155, %s169
    %p171 = scmp.eq.s32.totalorder %s19, 0
    %p172 = por %p170, %p171
    %s173 = ssub.s32 %s13, %s20
    %p174 = scmp.eq.s32.totalorder %s173, 0
    %s176 = sadd.s32 %s175, 1
    %s177 = scalar_select %p174, %s175, %s176
    %p180 = pneg %p174
    %p181 = scmp.eq.s32.totalorder %s13, 1
    %p182 = por %p180, %p181
    %p183 = scmp.ne.s32.totalorder %s175, %s178
    %p184 = scmp.eq.s32.totalorder %s13, 0
    %p185 = por %p183, %p184
    %p186 = scmp.ne.s32.totalorder %s175, %s178
    %p187 = scmp.eq.s32.totalorder %s18, 1
    %p188 = por %p186, %p187
    %p189 = scmp.ne.s32.totalorder %s178, %s179
    %p190 = scmp.eq.s32.totalorder %s18, 0
    %p191 = por %p189, %p190
    %p192 = scmp.ne.s32.totalorder %s178, %s179
    %p193 = scmp.eq.s32.totalorder %s19, 1
    %p194 = por %p192, %p193
    %p196 = scmp.ne.s32.totalorder %s179, %s195
    %p197 = scmp.eq.s32.totalorder %s19, 0
    %p198 = por %p196, %p197
    %p199 = scmp.le.s32.totalorder 1, %s13
    %p200 = scmp.lt.s32.totalorder %s13, 3
    %p201 = pnand %p199, %p200
    %p202 = pneg %p201
    // Predicated region
    $region9: #{mlp_forward.1} parent=5 // pred_check
      _
    $region10: #{mlp_forward.1} parent=5 // pred_check_branch
      %204 = sbr.rel (%p201) target = $region12
    $region11: #{mlp_forward.1} parent=5 // pred_region
      %s205 = ssub.s32 %s13, 1
      // Predicated region
      $region13: #{mlp_forward.1} parent=11 // pred_check
        %p206 = pneg %p60
      $region14: #{mlp_forward.1} parent=11 // pred_check_branch
        %208 = sbr.rel (%p206) target = $region16
      $region15: #{mlp_forward.1} parent=11 // pred_region
        _
      $region16: #{mlp_forward.1} parent=11 // pred_fallthru
        _
      // Predicated region
      $region17: #{mlp_forward.1} parent=11 // pred_check
        %p209 = pneg %p81
      $region18: #{mlp_forward.1} parent=11 // pred_check_branch
        %211 = sbr.rel (%p209) target = $region20
      $region19: #{mlp_forward.1} parent=11 // pred_region
        _
      $region20: #{mlp_forward.1} parent=11 // pred_fallthru
        _
      // Predicated region
      $region21: #{mlp_forward.1} parent=11 // pred_check
        %p212 = pneg %p102
      $region22: #{mlp_forward.1} parent=11 // pred_check_branch
        %214 = sbr.rel (%p212) target = $region24
      $region23: #{mlp_forward.1} parent=11 // pred_region
        _
      $region24: #{mlp_forward.1} parent=11 // pred_fallthru
        _
      // Predicated region
      $region25: #{mlp_forward.1} parent=11 // pred_check
        %p215 = pneg %p123
      $region26: #{mlp_forward.1} parent=11 // pred_check_branch
        %217 = sbr.rel (%p215) target = $region28
      $region27: #{mlp_forward.1} parent=11 // pred_region
        _
      $region28: #{mlp_forward.1} parent=11 // pred_fallthru
        _
      // Predicated region
      $region29: #{mlp_forward.1} parent=11 // pred_check
        %p218 = pneg %p144
      $region30: #{mlp_forward.1} parent=11 // pred_check_branch
        %220 = sbr.rel (%p218) target = $region32
      $region31: #{mlp_forward.1} parent=11 // pred_region
        _
      $region32: #{mlp_forward.1} parent=11 // pred_fallthru
        _
      // Predicated region
      $region33: #{mlp_forward.1} parent=11 // pred_check
        %p221 = pneg %p165
      $region34: #{mlp_forward.1} parent=11 // pred_check_branch
        %223 = sbr.rel (%p221) target = $region36
      $region35: #{mlp_forward.1} parent=11 // pred_region
        _
      $region36: #{mlp_forward.1} parent=11 // pred_fallthru
        _
    $region12: #{mlp_forward.1} parent=5 // pred_fallthru
      _
    %p224 = scmp.lt.s32.totalorder %s13, 2
    // Predicated region
    $region37: #{mlp_forward.1} parent=5 // pred_check
      %p225 = pneg %p224
    $region38: #{mlp_forward.1} parent=5 // pred_check_branch
      %227 = sbr.rel (%p225) target = $region40
    $region39: #{mlp_forward.1} parent=5 // pred_region
      // Predicated region
      $region41: #{mlp_forward.1} parent=39 // pred_check
        %p228 = pneg %p33
      $region42: #{mlp_forward.1} parent=39 // pred_check_branch
        %230 = sbr.rel (%p228) target = $region44
      $region43: #{mlp_forward.1} parent=39 // pred_region
        %s231 = smul.u32 2, %s13
        %p232 = scmp.lt.s32.totalorder %s231, 3
        %s233 = scalar_select %p232, %s231, 3
        %s234 = smul.addr %s233, 4
        %s235 = scalar_lea.vmem %s0, %s234
        %s236 = smul.u32 2, %s13
      $region44: #{mlp_forward.1} parent=39 // pred_fallthru
        _
    $region40: #{mlp_forward.1} parent=5 // pred_fallthru
      _
    %p237 = scmp.le.s32.totalorder 1, %s13
    %p238 = scmp.lt.s32.totalorder %s13, 3
    %p239 = pnand %p237, %p238
    %p240 = pneg %p239
    // Predicated region
    $region45: #{mlp_forward.1} parent=5 // pred_check
      _
    $region46: #{mlp_forward.1} parent=5 // pred_check_branch
      %242 = sbr.rel (%p239) target = $region48
    $region47: #{mlp_forward.1} parent=5 // pred_region
      %s243 = ssub.s32 %s13, 1
      %s244 = smul.u32 2, %s18
      %p245 = scmp.lt.s32.totalorder %s244, 3
      %s246 = scalar_select %p245, %s244, 3
      %s247 = smul.addr %s246, 4
      %s248 = scalar_lea.vmem %s0, %s247
      %p249 = pneg %p39
      %p250 = pneg %p36
      %p251 = pneg %p60
      %p252 = pneg %p57
      %p253 = pneg %p81
      %p254 = pneg %p78
      %p255 = pneg %p102
      %p256 = pneg %p99
      %p257 = pneg %p123
      %p258 = pneg %p120
      %p259 = pneg %p144
      %p260 = pneg %p141
      %p261 = pneg %p165
      %p262 = pneg %p162
      %p263 = pneg %p191
      %p264 = pneg %p188
      %s265 = smul.u32 2, %s18
      %p266 = scmp.lt.s32.totalorder %s265, 3
      %s267 = scalar_select %p266, %s265, 3
      %s268 = smul.addr %s267, 8
      %s269 = scalar_lea.vmem %s7, %s268
      %s270 = smul.u32 2, %s18
      %p271 = scmp.lt.s32.totalorder %s270, 3
      %s272 = scalar_select %p271, %s270, 3
      %s273 = smul.addr %s272, 4
      %s274 = scalar_lea.vmem %s0, %s273
      %s275 = smul.u32 2, %s18
      %s276 = smul.u32 2, %s18
      %p277 = scmp.lt.s32.totalorder %s276, 3
      %s278 = scalar_select %p277, %s276, 3
      %s279 = smul.addr %s278, 8
      %s280 = scalar_lea.vmem %s7, %s279
      %s281 = smul.u32 2, %s18
      %v283 = vld [vmem:[%s274] sm:$0xf]
      %v284 = vld [vmem:[%s274 + $0x4] sm:$0xf]
      %v285 = vld [vmem:[%s1] sm:$0xf]
      %v286 = vld [vmem:[%s1 + $0x4] sm:$0xf]
      %v287 = vld [vmem:[%s2] sm:$0x1]
      %v289 = vlaneseq
      %v290 = vshrl.u32 %v289, 7
      %v291 = vsub.s32 0, %v290
      %v292 = vrot.slane %v287, %v291
      %v296 = vunpack.c.l.b16 %v283
      %v297 = vunpack.c.l.b16 %v284
      %v298 = vpack.c.b16 %v297, %v296
      %v301 = vunpack.c.l.b16 %v285
      %v302 = vunpack.c.l.b16 %v286
      %v303 = vpack.c.b16 %v302, %v301
      %vm305 = vcmask 130048
      %v307 = vsel %vm305, %v298, 0
      %309 = vmatprep.subr.bf16.mxu0 0
      %310 = vmatpush1.bf16.msra.mxu0 %v303
      %311 = vmatprep.subr.bf16.mxu0 0
      %312 = vmatpush1.bf16.msra.mxu0 0
      %313 = vmatprep.subr.bf16.mxu0 0
      %314 = vmatpush1.bf16.msra.mxu0 0
      %315 = vmatprep.subr.bf16.mxu0 0
      %316 = vmatpush1.bf16.msra.mxu0 0
      %317 = vmatprep.subr.bf16.mxu0 0
      %318 = vmatpush1.bf16.msra.mxu0 0
      %319 = vmatprep.subr.bf16.mxu0 0
      %320 = vmatpush1.bf16.msra.mxu0 0
      %321 = vmatprep.subr.bf16.mxu0 0
      %322 = vmatpush1.bf16.msra.mxu0 0
      %323 = vmatprep.subr.bf16.mxu0 0
      %324 = vmatpush1.bf16.msra.mxu0 0
      %325 = vmatprep.subr.bf16.mxu0 0
      %326 = vmatpush1.bf16.msra.mxu0 0
      %327 = vmatprep.subr.bf16.mxu0 0
      %328 = vmatpush1.bf16.msra.mxu0 0
      %329 = vmatprep.subr.bf16.mxu0 0
      %330 = vmatpush1.bf16.msra.mxu0 0
      %331 = vmatprep.subr.bf16.mxu0 0
      %332 = vmatpush1.bf16.msra.mxu0 0
      %333 = vmatprep.subr.bf16.mxu0 0
      %334 = vmatpush1.bf16.msra.mxu0 0
      %335 = vmatprep.subr.bf16.mxu0 0
      %336 = vmatpush1.bf16.msra.mxu0 0
      %337 = vmatprep.subr.bf16.mxu0 0
      %338 = vmatpush1.bf16.msra.mxu0 0
      %339 = vmatprep.subr.bf16.mxu0 0
      %340 = vmatpush1.bf16.msra.mxu0 0
      %341 = vmatprep.mubr.bf16.mxu0 0
      %342 = vmatmul.mubr.bf16.gmra.mrb[0].mxu0 %v307
      %v343 = vpop.f32.mrb[0].mxu0
      %v344 = vadd.f32 %v292, %v343
      %v345 = vpop.f32.mrb[0].mxu0
      %v346 = vpop.f32.mrb[0].mxu0
      %v347 = vadd.f32 %v292, %v346
      %v348 = vpop.f32.mrb[0].mxu0
      %349 = vdwg.mxu0
      %v350 = vmax.f32 %v344, 0.0
      %v351 = vmax.f32 %v347, 0.0
      %v352 = vpack.c.bf16 %v351, %v350
      %v353 = vld [vmem:[%s3] sm:$0xf]
      %v354 = vld [vmem:[%s3 + $0x4] sm:$0xf]
      %v355 = vld [vmem:[%s3 + $0x8] sm:$0xf]
      %v356 = vld [vmem:[%s3 + $0xc] sm:$0xf]
      %v357 = vld [vmem:[%s3 + $0x10] sm:$0xf]
      %v358 = vld [vmem:[%s3 + $0x14] sm:$0xf]
      %v359 = vld [vmem:[%s3 + $0x18] sm:$0xf]
      %v360 = vld [vmem:[%s3 + $0x1c] sm:$0xf]
      %v361 = vld [vmem:[%s3 + $0x20] sm:$0xf]
      %v362 = vld [vmem:[%s3 + $0x24] sm:$0xf]
      %v363 = vld [vmem:[%s3 + $0x28] sm:$0xf]
      %v364 = vld [vmem:[%s3 + $0x2c] sm:$0xf]
      %v365 = vld [vmem:[%s3 + $0x30] sm:$0xf]
      %v366 = vld [vmem:[%s3 + $0x34] sm:$0xf]
      %v367 = vld [vmem:[%s3 + $0x38] sm:$0xf]
      %v368 = vld [vmem:[%s3 + $0x3c] sm:$0xf]
      %v369 = vld [vmem:[%s4] sm:$0x1]
      %v371 = vlaneseq
      %v372 = vshrl.u32 %v371, 7
      %v373 = vsub.s32 0, %v372
      %v374 = vrot.slane %v369, %v373
      %v392 = vunpack.c.l.b16 %v353
      %v393 = vunpack.c.l.b16 %v354
      %v394 = vunpack.c.l.b16 %v355
      %v395 = vunpack.c.l.b16 %v356
      %v396 = vunpack.c.l.b16 %v357
      %v397 = vunpack.c.l.b16 %v358
      %v398 = vunpack.c.l.b16 %v359
      %v399 = vunpack.c.l.b16 %v360
      %v400 = vunpack.c.l.b16 %v361
      %v401 = vunpack.c.l.b16 %v362
      %v402 = vunpack.c.l.b16 %v363
      %v403 = vunpack.c.l.b16 %v364
      %v404 = vunpack.c.l.b16 %v365
      %v405 = vunpack.c.l.b16 %v366
      %v406 = vunpack.c.l.b16 %v367
      %v407 = vunpack.c.l.b16 %v368
      %v408 = vpack.c.b16 %v393, %v392
      %v409 = vpack.c.b16 %v395, %v394
      %v410 = vpack.c.b16 %v397, %v396
      %v411 = vpack.c.b16 %v399, %v398
      %v412 = vpack.c.b16 %v401, %v400
      %v413 = vpack.c.b16 %v403, %v402
      %v414 = vpack.c.b16 %v405, %v404
      %v415 = vpack.c.b16 %v407, %v406
      %424 = vmatprep.subr.bf16.mxu0 0
      %425 = vmatpush1.bf16.msra.mxu0 %v408
      %426 = vmatprep.subr.bf16.mxu0 0
      %427 = vmatpush1.bf16.msra.mxu0 %v409
      %428 = vmatprep.subr.bf16.mxu0 0
      %429 = vmatpush1.bf16.msra.mxu0 %v410
      %430 = vmatprep.subr.bf16.mxu0 0
      %431 = vmatpush1.bf16.msra.mxu0 %v411
      %432 = vmatprep.subr.bf16.mxu0 0
      %433 = vmatpush1.bf16.msra.mxu0 %v412
      %434 = vmatprep.subr.bf16.mxu0 0
      %435 = vmatpush1.bf16.msra.mxu0 %v413
      %436 = vmatprep.subr.bf16.mxu0 0
      %437 = vmatpush1.bf16.msra.mxu0 %v414
      %438 = vmatprep.subr.bf16.mxu0 0
      %439 = vmatpush1.bf16.msra.mxu0 %v415
      %440 = vmatprep.subr.bf16.mxu0 0
      %441 = vmatpush1.bf16.msra.mxu0 0
      %442 = vmatprep.subr.bf16.mxu0 0
      %443 = vmatpush1.bf16.msra.mxu0 0
      %444 = vmatprep.subr.bf16.mxu0 0
      %445 = vmatpush1.bf16.msra.mxu0 0
      %446 = vmatprep.subr.bf16.mxu0 0
      %447 = vmatpush1.bf16.msra.mxu0 0
      %448 = vmatprep.subr.bf16.mxu0 0
      %449 = vmatpush1.bf16.msra.mxu0 0
      %450 = vmatprep.subr.bf16.mxu0 0
      %451 = vmatpush1.bf16.msra.mxu0 0
      %452 = vmatprep.subr.bf16.mxu0 0
      %453 = vmatpush1.bf16.msra.mxu0 0
      %454 = vmatprep.subr.bf16.mxu0 0
      %455 = vmatpush1.bf16.msra.mxu0 0
      %456 = vmatprep.mubr.bf16.mxu0 0
      %457 = vmatmul.mubr.bf16.gmra.mrb[0].mxu0 %v352
      %v458 = vpop.f32.mrb[0].mxu0
      %v459 = vadd.f32 %v374, %v458
      %v460 = vpop.f32.mrb[0].mxu0
      %v461 = vpop.f32.mrb[0].mxu0
      %v462 = vadd.f32 %v374, %v461
      %v463 = vpop.f32.mrb[0].mxu0
      %464 = vdwg.mxu0
      %v465 = vmax.f32 %v459, 0.0
      %v466 = vmax.f32 %v462, 0.0
      %v467 = vpack.c.bf16 %v466, %v465
      %v468 = vld [vmem:[%s5] sm:$0xf]
      %v469 = vld [vmem:[%s5 + $0x4] sm:$0xf]
      %v470 = vld [vmem:[%s5 + $0x8] sm:$0xf]
      %v471 = vld [vmem:[%s5 + $0xc] sm:$0xf]
      %v472 = vld [vmem:[%s5 + $0x10] sm:$0xf]
      %v473 = vld [vmem:[%s5 + $0x14] sm:$0xf]
      %v474 = vld [vmem:[%s5 + $0x18] sm:$0xf]
      %v475 = vld [vmem:[%s5 + $0x1c] sm:$0xf]
      %v476 = vld [vmem:[%s5 + $0x20] sm:$0xf]
      %v477 = vld [vmem:[%s5 + $0x24] sm:$0xf]
      %v478 = vld [vmem:[%s5 + $0x28] sm:$0xf]
      %v479 = vld [vmem:[%s5 + $0x2c] sm:$0xf]
      %v480 = vld [vmem:[%s5 + $0x30] sm:$0xf]
      %v481 = vld [vmem:[%s5 + $0x34] sm:$0xf]
      %v482 = vld [vmem:[%s5 + $0x38] sm:$0xf]
      %v483 = vld [vmem:[%s5 + $0x3c] sm:$0xf]
      %v484 = vld [vmem:[%s6] sm:$0x1]
      %v486 = vlaneseq
      %v487 = vshrl.u32 %v486, 7
      %v488 = vsub.s32 0, %v487
      %v489 = vrot.slane %v484, %v488
      %v507 = vunpack.c.l.b16 %v468
      %v508 = vunpack.c.l.b16 %v469
      %v509 = vunpack.c.l.b16 %v470
      %v510 = vunpack.c.l.b16 %v471
      %v511 = vunpack.c.l.b16 %v472
      %v512 = vunpack.c.l.b16 %v473
      %v513 = vunpack.c.l.b16 %v474
      %v514 = vunpack.c.l.b16 %v475
      %v515 = vunpack.c.l.b16 %v476
      %v516 = vunpack.c.l.b16 %v477
      %v517 = vunpack.c.l.b16 %v478
      %v518 = vunpack.c.l.b16 %v479
      %v519 = vunpack.c.l.b16 %v480
      %v520 = vunpack.c.l.b16 %v481
      %v521 = vunpack.c.l.b16 %v482
      %v522 = vunpack.c.l.b16 %v483
      %v523 = vpack.c.b16 %v508, %v507
      %v524 = vpack.c.b16 %v510, %v509
      %v525 = vpack.c.b16 %v512, %v511
      %v526 = vpack.c.b16 %v514, %v513
      %v527 = vpack.c.b16 %v516, %v515
      %v528 = vpack.c.b16 %v518, %v517
      %v529 = vpack.c.b16 %v520, %v519
      %v530 = vpack.c.b16 %v522, %v521
      %539 = vmatprep.subr.bf16.mxu0 0
      %540 = vmatpush1.bf16.msra.mxu0 %v523
      %541 = vmatprep.subr.bf16.mxu0 0
      %542 = vmatpush1.bf16.msra.mxu0 %v524
      %543 = vmatprep.subr.bf16.mxu0 0
      %544 = vmatpush1.bf16.msra.mxu0 %v525
      %545 = vmatprep.subr.bf16.mxu0 0
      %546 = vmatpush1.bf16.msra.mxu0 %v526
      %547 = vmatprep.subr.bf16.mxu0 0
      %548 = vmatpush1.bf16.msra.mxu0 %v527
      %549 = vmatprep.subr.bf16.mxu0 0
      %550 = vmatpush1.bf16.msra.mxu0 %v528
      %551 = vmatprep.subr.bf16.mxu0 0
      %552 = vmatpush1.bf16.msra.mxu0 %v529
      %553 = vmatprep.subr.bf16.mxu0 0
      %554 = vmatpush1.bf16.msra.mxu0 %v530
      %555 = vmatprep.subr.bf16.mxu0 0
      %556 = vmatpush1.bf16.msra.mxu0 0
      %557 = vmatprep.subr.bf16.mxu0 0
      %558 = vmatpush1.bf16.msra.mxu0 0
      %559 = vmatprep.subr.bf16.mxu0 0
      %560 = vmatpush1.bf16.msra.mxu0 0
      %561 = vmatprep.subr.bf16.mxu0 0
      %562 = vmatpush1.bf16.msra.mxu0 0
      %563 = vmatprep.subr.bf16.mxu0 0
      %564 = vmatpush1.bf16.msra.mxu0 0
      %565 = vmatprep.subr.bf16.mxu0 0
      %566 = vmatpush1.bf16.msra.mxu0 0
      %567 = vmatprep.subr.bf16.mxu0 0
      %568 = vmatpush1.bf16.msra.mxu0 0
      %569 = vmatprep.subr.bf16.mxu0 0
      %570 = vmatpush1.bf16.msra.mxu0 0
      %571 = vmatprep.mubr.bf16.mxu0 0
      %572 = vmatmul.mubr.bf16.gmra.mrb[0].mxu0 %v467
      %v573 = vpop.f32.mrb[0].mxu0
      %v574 = vadd.f32 %v489, %v573
      %v575 = vpop.f32.mrb[0].mxu0
      %v576 = vpop.f32.mrb[0].mxu0
      %v577 = vadd.f32 %v489, %v576
      %v578 = vpop.f32.mrb[0].mxu0
      %579 = vdwg.mxu0
      %580 = vst [vmem:[%s280] sm:$0xff] %v574
      %581 = vst [vmem:[%s280 + $0x8] sm:$0xff] %v577
      %s582 = smul.u32 2, %s18
      %p583 = scmp.lt.s32.totalorder %s582, 3
      %s584 = scalar_select %p583, %s582, 3
      %s585 = smul.addr %s584, 8
      %s586 = scalar_lea.vmem %s7, %s585
      // Predicated region
      $region49: #{mlp_forward.1} parent=47 // pred_check
        %p587 = pneg %p188
      $region50: #{mlp_forward.1} parent=47 // pred_check_branch
        %589 = sbr.rel (%p587) target = $region52
      $region51: #{mlp_forward.1} parent=47 // pred_region
        %s590 = smul.u32 2, %s18
      $region52: #{mlp_forward.1} parent=47 // pred_fallthru
        _
    $region48: #{mlp_forward.1} parent=5 // pred_fallthru
      _
    %p591 = scmp.le.s32.totalorder 2, %s13
    // Predicated region
    $region53: #{mlp_forward.1} parent=5 // pred_check
      %p592 = pneg %p591
    $region54: #{mlp_forward.1} parent=5 // pred_check_branch
      %594 = sbr.rel (%p592) target = $region56
    $region55: #{mlp_forward.1} parent=5 // pred_region
      %s595 = ssub.s32 %s13, 2
      // Predicated region
      $region57: #{mlp_forward.1} parent=55 // pred_check
        %p596 = pneg %p194
      $region58: #{mlp_forward.1} parent=55 // pred_check_branch
        %598 = sbr.rel (%p596) target = $region60
      $region59: #{mlp_forward.1} parent=55 // pred_region
        %s599 = smul.u32 2, %s19
        %p600 = scmp.lt.s32.totalorder %s599, 3
        %s601 = scalar_select %p600, %s599, 3
        %s602 = smul.addr %s601, 8
        %s603 = scalar_lea.vmem %s7, %s602
      $region60: #{mlp_forward.1} parent=55 // pred_fallthru
        _
    $region56: #{mlp_forward.1} parent=5 // pred_fallthru
      _
  $region6: #{mlp_forward.1} parent=0 // loop_footer
    %s17 = sadd.s32 1, %s13
  $region7: #{mlp_forward.1} parent=0 // loop_footer_branch
    %12 = sbr.rel target = $region3
  $region8: #{mlp_forward.1} parent=0 // loop_exit
    _

</llo_original>
